<compile_context>
chip_gen: v7x
topology: tpu7x:2x2x1
jax: 0.10.0
libtpu: 0.0.40
codegen_flags: <defaults>
</compile_context>

<pallas_src>
import functools

import jax
import jax.numpy as jnp
from jax import lax
from jax.experimental import pallas as pl
from jax.experimental.pallas import tpu as pltpu

SUBLANES = 8
TARGET_BLOCK_ELEMS = 1 << 20          # ~4 MiB per f32 streamed block


def _cdiv(a, b):
    return -(-a // b)


def _vmem_capacity_bytes():
    """Per-core VMEM capacity (128 MiB on v5e/v6e, 64 MiB on v7x)."""
    try:
        info = pltpu.get_tpu_info()
        cap = int(getattr(info, "vmem_capacity_bytes", 0) or 0)
        if cap > 0:
            return cap
    except Exception:
        pass
    return 128 << 20


def _pick_cols(n):
    for c in (1024, 512, 256, 128):
        if n % c == 0:
            return c
    return None


def _pick_tile_rows(rows, c):
    target = max(SUBLANES, (TARGET_BLOCK_ELEMS // c) // SUBLANES * SUBLANES)
    if rows <= target:
        return rows                   # single full-extent block along rows
    return target                     # multiple of 8; ragged tail via masking


def _fold_rows_max(a, tm):
    """Fold (tm, c) rows into groups of 8 with pure-VPU maxima.

    Slices are sublane-aligned (multiples of 8), so no XLU cross-lane work.
    Returns (8, c) when tm is a multiple of 8, otherwise the input unchanged
    (only possible for a single full-extent block).
    """
    if tm % SUBLANES != 0 or tm <= SUBLANES:
        return a
    m = a[:SUBLANES]
    for off in range(SUBLANES, tm, SUBLANES):
        m = jnp.maximum(m, a[off:off + SUBLANES])
    return m


# --------------------------------------------------------------------------
# Fused single-pass kernel: whole tensor resident in VMEM, no grid, no
# pipeline double-buffering.  tanh computed exactly once.
# --------------------------------------------------------------------------
def _dorefa_fused_kernel(x_ref, o_ref, *, s2, s3, half_scale):
    x = x_ref[...].astype(jnp.float32)
    t = jnp.tanh(x)
    maxv = jnp.max(jnp.abs(t))                 # NaN if all-zero (matches PyTorch)
    s1 = jnp.float32(half_scale) / maxv
    o_ref[...] = (jnp.round(t * s1 + s2) * s3 - 1.0).astype(o_ref.dtype)


# --------------------------------------------------------------------------
# VMEM-resident kernel: grid = (2, grid_n).
#   phase 0: stream block i in, stash it in a persistent VMEM slab, accumulate
#            a per-lane running max of |x| (pure VPU folds).
#   phase 1: quantize block i straight out of the slab.
# HBM traffic: 1 read + 1 write (plus one redundant block fetch at the phase
# transition).  Outputs for phase-0 steps all map to block 0 and are never
# written, so no garbage is ever flushed (writeback only on index change).
# --------------------------------------------------------------------------
def _dorefa_resident_kernel(x_ref, o_ref, slab_ref, mstat_ref, *,
                            tm, rows, s2, s3, half_scale, need_mask):
    p = pl.program_id(0)
    i = pl.program_id(1)

    @pl.when(p == 0)
    def _():
        @pl.when(i == 0)
        def _():
            mstat_ref[...] = jnp.zeros_like(mstat_ref)
        x = x_ref[...]
        slab_ref[i] = x                        # keep native-dtype block resident
        a = jnp.abs(x.astype(jnp.float32))
        if need_mask:
            rem = rows - i * tm                # valid rows in this block
            rid = lax.broadcasted_iota(jnp.int32, a.shape, 0)
            a = jnp.where(rid < rem, a, 0.0)   # garbage beyond n can't poison max
        mstat_ref[...] = jnp.maximum(mstat_ref[...], _fold_rows_max(a, tm))

    @pl.when(p == 1)
    def _():
        mx = jnp.max(mstat_ref[...], keepdims=True)        # (1, 1) = max|x|
        s1 = jnp.float32(half_scale) / jnp.tanh(mx)         # = half_scale/max|tanh|
        x = slab_ref[i].astype(jnp.float32)
        o_ref[...] = (jnp.round(jnp.tanh(x) * s1 + s2) * s3 - 1.0).astype(o_ref.dtype)


# --------------------------------------------------------------------------
# Tiled pass 1: per-block per-lane partial max of |x| (no tanh over the data).
# Ragged last block masked with iota; row groups folded with pure-VPU maxima.
# --------------------------------------------------------------------------
def _maxabs_partial_kernel(x_ref, o_ref, *, tm, rows, need_mask):
    i = pl.program_id(0)
    a = jnp.abs(x_ref[...].astype(jnp.float32))
    if need_mask:
        rem = rows - i * tm
        rid = lax.broadcasted_iota(jnp.int32, a.shape, 0)
        a = jnp.where(rid < rem, a, 0.0)
    o_ref[...] = _fold_rows_max(a, tm)


# --------------------------------------------------------------------------
# Tiled pass 2: elementwise quantization.  The runtime scalar s1 rides in
# SMEM; s2 / s3 are compile-time constants.  Out-of-range tail writes of the
# last partial block are dropped by the block pipeline.
# --------------------------------------------------------------------------
def _dorefa_quant_kernel(s1_ref, x_ref, o_ref, *, s2, s3):
    x = x_ref[...].astype(jnp.float32)
    s1 = s1_ref[0]
    o_ref[...] = (jnp.round(jnp.tanh(x) * s1 + s2) * s3 - 1.0).astype(o_ref.dtype)


# --------------------------------------------------------------------------
# Wrapper
# --------------------------------------------------------------------------
def dorefa_w(inp: jax.Array, nbit_w: int, *,
             fused_limit_bytes=None, resident_limit_bytes=None) -> jax.Array:
    """DoReFaW.forward(inp, nbit_w)."""
    if nbit_w == 32:
        return inp

    orig_shape = inp.shape
    orig_dtype = inp.dtype
    n = inp.size
    if n == 0:
        return inp

    scale = float(2 ** nbit_w - 1)
    half_scale = 0.5 * scale
    s2 = 0.5 * scale
    s3 = 2.0 / scale

    esize = jnp.dtype(orig_dtype).itemsize
    nbytes = n * esize

    cap = _vmem_capacity_bytes()
    big_vmem = cap >= (96 << 20)               # v5e/v6e: 128 MiB; v7x: 64 MiB
    if fused_limit_bytes is None:
        fused_limit_bytes = (16 << 20) if big_vmem else (8 << 20)
    if resident_limit_bytes is None:
        resident_limit_bytes = (40 << 20) if big_vmem else (20 << 20)
    vmem_big = (cap * 3) // 4                  # 96 MiB (v5e/v6e) / 48 MiB (v7x)
    vmem_tiled = min(64 << 20, vmem_big)

    flat = inp.reshape(-1)
    c = _pick_cols(n)
    trimmed = False
    if c is None:
        # TODO(synk): n not divisible by 128 — keep the (rare) pad/slice fallback.
        c = 1024
        rows = _cdiv(n, c)
        flat = jnp.pad(flat, (0, rows * c - n))
        trimmed = True
    else:
        rows = n // c
    x2d = flat.reshape(rows, c)                # free metadata reshape

    if nbytes <= fused_limit_bytes:
        # ---------------- fused single-pass path ----------------
        out2d = pl.pallas_call(
            functools.partial(_dorefa_fused_kernel,
                              s2=s2, s3=s3, half_scale=half_scale),
            out_shape=jax.ShapeDtypeStruct((rows, c), orig_dtype),
            in_specs=[pl.BlockSpec(memory_space=pltpu.MemorySpace.VMEM)],
            out_specs=pl.BlockSpec(memory_space=pltpu.MemorySpace.VMEM),
            compiler_params=pltpu.CompilerParams(vmem_limit_bytes=vmem_big),
        )(x2d)
    else:
        tm = _pick_tile_rows(rows, c)
        grid_n = _cdiv(rows, tm)
        orows = SUBLANES if tm % SUBLANES == 0 else tm
        need_mask = (rows % tm) != 0

        if nbytes <= resident_limit_bytes:
            # ---------------- VMEM-resident single-read path ----------------
            out2d = pl.pallas_call(
                functools.partial(_dorefa_resident_kernel, tm=tm, rows=rows,
                                  s2=s2, s3=s3, half_scale=half_scale,
                                  need_mask=need_mask),
                out_shape=jax.ShapeDtypeStruct((rows, c), orig_dtype),
                grid_spec=pltpu.PrefetchScalarGridSpec(
                    num_scalar_prefetch=0,
                    grid=(2, grid_n),
                    in_specs=[pl.BlockSpec((tm, c),
                                           lambda p, i: (i * (1 - p), 0))],
                    out_specs=pl.BlockSpec((tm, c),
                                           lambda p, i: (i * p, 0)),
                    scratch_shapes=[pltpu.VMEM((grid_n, tm, c), orig_dtype),
                                    pltpu.VMEM((orows, c), jnp.float32)]),
                compiler_params=pltpu.CompilerParams(
                    dimension_semantics=("arbitrary", "arbitrary"),
                    vmem_limit_bytes=vmem_big),
            )(x2d)
        else:
            # ---------------- tiled two-pass path ----------------
            # Pass 1: per-block per-lane partial max of |x|.
            partials = pl.pallas_call(
                functools.partial(_maxabs_partial_kernel, tm=tm, rows=rows,
                                  need_mask=need_mask),
                out_shape=jax.ShapeDtypeStruct((grid_n * orows, c),
                                               jnp.float32),
                grid_spec=pltpu.PrefetchScalarGridSpec(
                    num_scalar_prefetch=0,
                    grid=(grid_n,),
                    in_specs=[pl.BlockSpec((tm, c), lambda i: (i, 0))],
                    out_specs=pl.BlockSpec((orows, c), lambda i: (i, 0))),
                compiler_params=pltpu.CompilerParams(
                    dimension_semantics=("parallel",),
                    vmem_limit_bytes=vmem_tiled),
            )(x2d)

            maxv_t = jnp.tanh(jnp.max(partials))      # = max(|tanh(x)|)
            s1 = jnp.reshape(jnp.float32(half_scale) / maxv_t, (1,))

            # Pass 2: elementwise quantize; s1 rides along in SMEM.
            out2d = pl.pallas_call(
                functools.partial(_dorefa_quant_kernel, s2=s2, s3=s3),
                out_shape=jax.ShapeDtypeStruct((rows, c), orig_dtype),
                grid_spec=pltpu.PrefetchScalarGridSpec(
                    num_scalar_prefetch=0,
                    grid=(grid_n,),
                    in_specs=[
                        pl.BlockSpec(memory_space=pltpu.MemorySpace.SMEM),
                        pl.BlockSpec((tm, c), lambda i: (i, 0)),
                    ],
                    out_specs=pl.BlockSpec((tm, c), lambda i: (i, 0))),
                compiler_params=pltpu.CompilerParams(
                    dimension_semantics=("parallel",),
                    vmem_limit_bytes=vmem_tiled),
            )(s1, x2d)

    out = out2d.reshape(-1)
    if trimmed:
        out = out[:n]
    return out.reshape(orig_shape)


# --------------------------------------------------------------------------
# Pure-JAX reference (mirrors the PyTorch forward exactly)
# --------------------------------------------------------------------------
def dorefa_w_ref(inp, nbit_w):
    if nbit_w == 32:
        return inp
    w = jnp.tanh(inp.astype(jnp.float32))
    maxv = jnp.max(jnp.abs(w))
    w = w / (2.0 * maxv) + 0.5
    scale = 2 ** nbit_w - 1
    q = jnp.round(scale * w) / scale
    return (2.0 * q - 1.0).astype(inp.dtype)


if __name__ == "__main__":
    key = jax.random.PRNGKey(0)
    # Weight-like NCHW tensor (e.g. conv weights).
    x = jax.random.normal(key, (2, 4, 16, 16), dtype=jnp.float32)

    # Fused single-pass path (typical weight-sized tensors).
    out = dorefa_w(x, 2)
    jax.block_until_ready(out)
    ref2 = dorefa_w_ref(x, 2)
    assert out.shape == x.shape and out.dtype == x.dtype
    assert jnp.allclose(out, ref2, atol=1e-5, rtol=1e-5), "fused path mismatch"

    # VMEM-resident single-HBM-read path (forced via zero fused limit).
    out_res = dorefa_w(x, 4, fused_limit_bytes=0)
    jax.block_until_ready(out_res)
    ref4 = dorefa_w_ref(x, 4)
    assert jnp.allclose(out_res, ref4, atol=1e-5, rtol=1e-5), \
        "resident path mismatch"

    # Tiled two-pass path (forced via zero fused + resident limits).
    out_tiled = dorefa_w(x, 3, fused_limit_bytes=0, resident_limit_bytes=0)
    jax.block_until_ready(out_tiled)
    ref3 = dorefa_w_ref(x, 3)
    assert jnp.allclose(out_tiled, ref3, atol=1e-5, rtol=1e-5), \
        "tiled path mismatch"

    # nbit_w == 32 passthrough path.
    out32 = dorefa_w(x, 32)
    jax.block_until_ready(out32)
    assert jnp.array_equal(out32, x)

    print("KERNEL_OK")
</pallas_src>

<mosaic_0001>
module attributes {stable_mosaic.version = 11 : i64} {
  func.func @_dorefa_fused_kernel(%arg0: memref<2x1024xf32, #tpu.memory_space<vmem>>, %arg1: memref<2x1024xf32, #tpu.memory_space<vmem>>) attributes {dimension_semantics = [], scalar_prefetch = 0 : i64, scratch_operands = 0 : i64, tpu.core_type = #tpu.core_type<tc>} {
    %c0 = arith.constant 0 : index
    %c0_0 = arith.constant 0 : index
    %0 = vector.load %arg0[%c0, %c0_0] : memref<2x1024xf32, #tpu.memory_space<vmem>>, vector<2x1024xf32>
    %1 = math.tanh %0 : vector<2x1024xf32>
    %2 = math.absf %1 : vector<2x1024xf32>
    %3 = vector.shape_cast %2 : vector<2x1024xf32> to vector<1x2x1024xf32>
    %cst = arith.constant dense<0xFF800000> : vector<1xf32>
    %4 = vector.multi_reduction <maximumf>, %3, %cst [1, 2] : vector<1x2x1024xf32> to vector<1xf32>
    %5 = vector.shape_cast %4 : vector<1xf32> to vector<1x1x1xf32>
    %6 = vector.extract %5[0, 0, 0] : f32 from vector<1x1x1xf32>
    %cst_1 = arith.constant 1.500000e+00 : f32
    %7 = arith.divf %cst_1, %6 : f32
    %8 = vector.broadcast %7 : f32 to vector<2x1024xf32>
    %9 = arith.mulf %1, %8 : vector<2x1024xf32>
    %cst_2 = arith.constant 1.500000e+00 : f32
    %10 = vector.broadcast %cst_2 : f32 to vector<2x1024xf32>
    %11 = arith.addf %9, %10 : vector<2x1024xf32>
    %12 = math.roundeven %11 : vector<2x1024xf32>
    %cst_3 = arith.constant 0.666666686 : f32
    %13 = vector.broadcast %cst_3 : f32 to vector<2x1024xf32>
    %14 = arith.mulf %12, %13 : vector<2x1024xf32>
    %cst_4 = arith.constant 1.000000e+00 : f32
    %15 = vector.broadcast %cst_4 : f32 to vector<2x1024xf32>
    %16 = arith.subf %14, %15 : vector<2x1024xf32>
    %c0_5 = arith.constant 0 : index
    %c0_6 = arith.constant 0 : index
    %17 = vector.load %arg1[%c0_5, %c0_6] : memref<2x1024xf32, #tpu.memory_space<vmem>>, vector<2x1024xf32>
    tpu.vector_store %arg1[%c0_5, %c0_6], %16 {strides = array<i32>} : memref<2x1024xf32, #tpu.memory_space<vmem>>, vector<2x1024xf32>,
    return
  }
}

</mosaic_0001>

<llo_original>
// kernel: tpu_custom_call.1
$region0: #{tpu_custom_call.1}
  #allocation0 [shape = 'u32[]', space=smem, size = 0x4, offset = 0x4, fixed_abs, tag = 'smem constant byte address 0x4 - core index']
  #allocation1 [shape = 'u32[144,128]{1,0:T(1,128)}', space=vmem, size = 0x12000, scoped, tag = 'internal scratch']
  %s0 = inlined_call_operand.hbm [shape: f32[2,1024], index: 0, kind: input, shape index: {}]
  %s1 = inlined_call_operand.hbm [shape: f32[2,1024], index: 1, kind: output, shape index: {}]
  %s2 = sld [smem:[#allocation0]]
  $region18: #{tpu_custom_call.1} parent=0
    _
  %s4 = ssub.s32 1, %s2
  %s5 = scalar_select 0, %s4, %s2
  $region1: #{tpu_custom_call.1} parent=0
    #allocation2 [shape = 'u8[8192]{0}', space=vmem, size = 0x2000, scoped, tag = 'input window, operand 0, single buffered']
    #allocation3 [shape = 's32[1]{0}', space=sflag, size = 0x4, scoped, tag = 'scoped memory for tpu_custom_call.1']
    #allocation4 [shape = 's32[1]{0}', space=sflag, size = 0x4, scoped, tag = 'scoped memory for tpu_custom_call.1']
    #allocation5 [shape = 'u8[8192]{0}', space=vmem, size = 0x2000, scoped, tag = 'output window, operand 0, single buffered']
    %6 = vsyncpa [#allocation3], 0
    %7 = vsyncpa [#allocation4], 0
    // Predicated region
    $region2: #{tpu_custom_call.1} parent=1 // pred_check
      _
    $region3: #{tpu_custom_call.1} parent=1 // pred_check_branch
      %9 = sbr.rel (0) target = $region5
    $region4: #{tpu_custom_call.1} parent=1 // pred_region
      %s11 = ssub.s32 256, 256
      %12 = vsyncadd [#allocation3], %s11
      %s14 = sshll.u32 [#allocation2], 4
      %s15 = int_to_ptr.vmem [resolvable:$true] %s14
      %17 = dma.hbm_to_vmem [thread:$0]  %s0, 256, %s15, [#allocation3]
    $region5: #{tpu_custom_call.1} parent=1 // pred_fallthru
      _
    // Predicated region
    $region6: #{tpu_custom_call.1} parent=1 // pred_check
      _
    $region7: #{tpu_custom_call.1} parent=1 // pred_check_branch
      %19 = sbr.rel (0) target = $region9
    $region8: #{tpu_custom_call.1} parent=1 // pred_region
      %20 = dma.done [#allocation3], 256
    $region9: #{tpu_custom_call.1} parent=1 // pred_fallthru
      _
    %v21 = vld [vmem:[#allocation2] sm:$0xff]
    %v22 = vld [vmem:[#allocation2 + $0x8] sm:$0xff]
    %v23 = vtanh.pop %v21
    %v24 = vtanh.pop %v22
    %v25 = vand.u32 2147483647, %v23
    %v26 = vand.u32 2147483647, %v24
    %v29 = vcombine.high %v25, %v25
    %v31 = vunpack.c.l.s4 1983009808
    %v32 = vunpack.c.0.s8 %v31
    %v33 = vlaneseq
    %v34 = vshrl.u32 %v33, 7
    %v35 = vsub.s32 %v32, %v34
    %v36 = vrot.slane %v25, %v35
    %v38 = vunpack.c.l.s4 1983009808
    %v39 = vunpack.c.0.s8 %v38
    %v40 = vlaneseq
    %v41 = vshrl.u32 %v40, 7
    %v42 = vsub.s32 %v39, %v41
    %v43 = vrot.slane %v29, %v42
    %v44 = vcombine.high %v36, %v36
    %v45 = vcombine.high %v43, %v43
    %v46 = vcombine.high %v26, %v26
    %v48 = vunpack.c.l.s4 1983009808
    %v49 = vunpack.c.0.s8 %v48
    %v50 = vlaneseq
    %v51 = vshrl.u32 %v50, 7
    %v52 = vsub.s32 %v49, %v51
    %v53 = vrot.slane %v26, %v52
    %v55 = vunpack.c.l.s4 1983009808
    %v56 = vunpack.c.0.s8 %v55
    %v57 = vlaneseq
    %v58 = vshrl.u32 %v57, 7
    %v59 = vsub.s32 %v56, %v58
    %v60 = vrot.slane %v46, %v59
    %v61 = vcombine.high %v53, %v53
    %v62 = vcombine.high %v60, %v60
    %vm71 = vcmask 1041408
    %v72 = vsel %vm71, %v36, -inf
    %v73 = vsel %vm71, %v44, -inf
    %v74 = vsel %vm71, %v43, -inf
    %v75 = vsel %vm71, %v45, -inf
    %v76 = vsel %vm71, %v53, -inf
    %v77 = vmax.f32 %v72, %v76
    %v78 = vsel %vm71, %v61, -inf
    %v79 = vmax.f32 %v73, %v78
    %v80 = vsel %vm71, %v60, -inf
    %v81 = vmax.f32 %v74, %v80
    %v82 = vsel %vm71, %v62, -inf
    %v83 = vmax.f32 %v75, %v82
    %v84 = vmax.f32 %v77, %v79
    %v85 = vmax.f32 %v81, %v83
    %v86 = vmax.f32 %v84, %v85
    %87 = vmax.xlane.f32.xlu0 %v86
    %v88 = vpop.xlane.xlu0 %87
    %v89 = vrot.slane %v88, 4
    %v90 = vmax.f32 %v88, %v89
    %v91 = vrot.slane %v90, 2
    %v92 = vmax.f32 %v90, %v91
    %v93 = vrot.slane %v92, 1
    %v94 = vmax.f32 %v92, %v93
    %s95 = vtos %v94
    %v96 = vstv %s95
    %v97 = vrcp.pop %v96
    %s98 = vtos %v97
    %s99 = smul.f32 1.5, %s98
    %v100 = vstv %s99
    %v101 = vmul.f32 %v23, %v100
    %v102 = vmul.f32 %v24, %v100
    %v103 = vadd.f32 %v101, 1.5
    %v104 = vadd.f32 %v102, 1.5
    %v105 = vround.ne.pseudo %v103
    %v106 = vround.ne.pseudo %v104
    %v107 = vmul.f32 %v105, 0.6666667
    %v108 = vmul.f32 %v106, 0.6666667
    %v109 = vsub.f32 %v107, 1.0
    %v110 = vsub.f32 %v108, 1.0
    %111 = vst [vmem:[#allocation5] sm:$0xff] %v109
    %112 = vst [vmem:[#allocation5 + $0x8] sm:$0xff] %v110
    // Predicated region
    $region10: #{tpu_custom_call.1} parent=1 // pred_check
      _
    $region11: #{tpu_custom_call.1} parent=1 // pred_check_branch
      %114 = sbr.rel (0) target = $region13
    $region12: #{tpu_custom_call.1} parent=1 // pred_region
      %s116 = ssub.s32 256, 256
      %117 = vsyncadd [#allocation4], %s116
      %s119 = sshll.u32 [#allocation5], 4
      %s120 = int_to_ptr.vmem [resolvable:$true] %s119
      %122 = dma.vmem_to_hbm [thread:$0]  %s120, 256, %s1, [#allocation4]
    $region13: #{tpu_custom_call.1} parent=1 // pred_fallthru
      _
    // Predicated region
    $region14: #{tpu_custom_call.1} parent=1 // pred_check
      _
    $region15: #{tpu_custom_call.1} parent=1 // pred_check_branch
      %124 = sbr.rel (0) target = $region17
    $region16: #{tpu_custom_call.1} parent=1 // pred_region
      %125 = dma.done [#allocation4], 256
    $region17: #{tpu_custom_call.1} parent=1 // pred_fallthru
      _
    %126 = vsyncpa [#allocation3], 1
    %127 = vsyncpa [#allocation4], 1

</llo_original>
